<compile_context>
chip_gen: v6e
topology: v6e:2x2x1
jax: 0.10.0
libtpu: 0.0.40
codegen_flags: <defaults>
</compile_context>

<pallas_src>
import jax
import jax.numpy as jnp
from jax.experimental import pallas as pl
from jax.experimental.pallas import tpu as pltpu


def _round_up(n: int, m: int) -> int:
    return (n + m - 1) // m * m


# --------------------------------------------------------------------------
# Kernels
# --------------------------------------------------------------------------
def _cross_kernel_resident(x0_ref, w_ref, b_ref, out_ref):
    # x0_ref: (bb, Dp)   w_ref: (L, Dp, Dp)   b_ref: (L, Dp)   out_ref: (bb, Dp)
    # When x.dtype is already f32 the astype folds to a no-op (no extra VMEM
    # copy of x0); the cross update reuses the same loaded value.
    x0 = x0_ref[...].astype(jnp.float32)
    bias = b_ref[...].astype(jnp.float32)                  # (L, Dp)
    w_dtype = w_ref.dtype

    x = x0
    num_layers = w_ref.shape[0]
    # L is small and static: fully unroll; weights are VMEM-resident.
    for l in range(num_layers):
        h = jnp.dot(x.astype(w_dtype), w_ref[l],
                    preferred_element_type=jnp.float32)    # MXU, f32 acc
        h = jnp.maximum(h + bias[l:l + 1], 0.0)            # bias + ReLU (f32 VPU)
        x = x0 * h + x                                     # cross update
    out_ref[...] = x.astype(out_ref.dtype)


def _cross_kernel_streamed(x0_ref, w_ref, b_ref, out_ref, acc_ref):
    # grid = (num_tiles, L), layer axis last ("arbitrary").
    # x0_ref : (bb, Dp)     resident across the layer axis (constant index)
    # w_ref  : (1, Dp, Dp)  current layer's weight
    # b_ref  : (1, Dp)      current layer's bias
    # out_ref: (bb, Dp)     same block across the layer axis -> written at end
    # acc_ref: (bb, Dp) f32 carried state x
    l = pl.program_id(1)
    x0 = x0_ref[...].astype(jnp.float32)

    @pl.when(l == 0)
    def _():
        acc_ref[...] = x0

    x = acc_ref[...]
    h = jnp.dot(x.astype(w_ref.dtype), w_ref[0],
                preferred_element_type=jnp.float32)        # MXU, f32 acc
    h = jnp.maximum(h + b_ref[...].astype(jnp.float32), 0.0)
    x_new = x0 * h + x
    acc_ref[...] = x_new

    @pl.when(l == pl.num_programs(1) - 1)
    def _():
        out_ref[...] = x_new.astype(out_ref.dtype)


# --------------------------------------------------------------------------
# Wrapper
# --------------------------------------------------------------------------
def cross_network(x, w_t, b, *, block_b: int = 512, weight_dtype=None,
                  stream_weights=None):
    """DCN cross-network forward.

    x            : (B, D)
    w_t          : (L, D, D) pre-transposed weights, i.e. x @ w_t[i] == x @ W_i^T
    b            : (L, D)
    block_b      : target batch rows per grid tile (rounded to a multiple of 8).
    weight_dtype : optional storage dtype for weights (e.g. jnp.bfloat16) to
                   halve HBM weight traffic; accumulation stays f32.
    stream_weights : None = auto (by VMEM footprint); True/False forces the
                   streamed / resident variant.
    """
    B, D = x.shape
    L = int(w_t.shape[0])
    if L == 0 or B == 0:
        return x

    if weight_dtype is not None:
        w_t = w_t.astype(weight_dtype)

    # Lane-dense feature dim.
    Dp = _round_up(max(D, 128), 128)

    # Sublane-aligned batch tile; prefer >= 2 tiles (v7x megacore) when the
    # batch is big enough to split.
    Bp8 = _round_up(B, 8)
    bb = min(_round_up(max(block_b, 8), 8), Bp8)
    if Bp8 // bb < 2 and Bp8 >= 16:
        bb = _round_up(-(-Bp8 // 2), 8)
    Bp = _round_up(B, bb)
    num_tiles = Bp // bb

    xbytes = jnp.dtype(x.dtype).itemsize
    wbytes = jnp.dtype(w_t.dtype).itemsize
    bbytes = jnp.dtype(b.dtype).itemsize

    # VMEM footprints (bytes).
    resident_fp = (L * Dp * Dp * wbytes + L * Dp * bbytes   # single-buffered weights/bias
                   + 4 * bb * Dp * xbytes                   # x0/out double buffers
                   + 4 * bb * Dp * 4)                       # f32 temporaries (x0, x, h)
    streamed_fp = (2 * Dp * Dp * wbytes + 2 * Dp * bbytes   # double-buffered layer weight/bias
                   + 4 * bb * Dp * xbytes                   # x0/out buffers
                   + bb * Dp * 4                            # carried-state scratch
                   + 3 * bb * Dp * 4)                       # f32 temporaries

    if stream_weights is None:
        # Stay well inside v7x's 64 MiB physical VMEM (per TensorCore).
        stream_weights = resident_fp > (24 << 20)

    # Zero-pad: padded lanes/rows stay exactly 0 through relu + cross update.
    x_p = jnp.pad(x, ((0, Bp - B), (0, Dp - D)))
    w_p = jnp.pad(w_t, ((0, 0), (0, Dp - D), (0, Dp - D)))
    b_p = jnp.pad(b, ((0, 0), (0, Dp - D)))

    flops = 2 * Bp * L * Dp * Dp + 4 * Bp * L * Dp
    if stream_weights:
        w_hbm = num_tiles * L * (Dp * Dp * wbytes + Dp * bbytes)
    else:
        w_hbm = L * (Dp * Dp * wbytes + Dp * bbytes)
    cost = pl.CostEstimate(flops=flops, transcendentals=0,
                           bytes_accessed=2 * Bp * Dp * xbytes + w_hbm)

    if not stream_weights:
        vmem_limit = int(min(max(resident_fp + (4 << 20), 16 << 20), 48 << 20))
        out = pl.pallas_call(
            _cross_kernel_resident,
            out_shape=jax.ShapeDtypeStruct((Bp, Dp), x.dtype),
            grid_spec=pltpu.PrefetchScalarGridSpec(
                num_scalar_prefetch=0,
                grid=(num_tiles,),
                in_specs=[
                    # Per-tile x0 (also the initial state).
                    pl.BlockSpec((bb, Dp), lambda i: (i, 0)),
                    # Grid-invariant weights/biases: single-buffered residents.
                    pl.BlockSpec((L, Dp, Dp), lambda i: (0, 0, 0),
                                 pipeline_mode=pl.Buffered(1)),
                    pl.BlockSpec((L, Dp), lambda i: (0, 0),
                                 pipeline_mode=pl.Buffered(1)),
                ],
                out_specs=pl.BlockSpec((bb, Dp), lambda i: (i, 0)),
            ),
            compiler_params=pltpu.CompilerParams(
                dimension_semantics=("parallel",),
                vmem_limit_bytes=vmem_limit,
            ),
            cost_estimate=cost,
        )(x_p, w_p, b_p)
    else:
        vmem_limit = int(min(max(streamed_fp + (4 << 20), 16 << 20), 48 << 20))
        out = pl.pallas_call(
            _cross_kernel_streamed,
            out_shape=jax.ShapeDtypeStruct((Bp, Dp), x.dtype),
            grid_spec=pltpu.PrefetchScalarGridSpec(
                num_scalar_prefetch=0,
                grid=(num_tiles, L),
                in_specs=[
                    pl.BlockSpec((bb, Dp), lambda i, l: (i, 0)),     # x0 resident over l
                    pl.BlockSpec((1, Dp, Dp), lambda i, l: (l, 0, 0)),
                    pl.BlockSpec((1, Dp), lambda i, l: (l, 0)),
                ],
                out_specs=pl.BlockSpec((bb, Dp), lambda i, l: (i, 0)),
                scratch_shapes=[pltpu.VMEM((bb, Dp), jnp.float32)],
            ),
            compiler_params=pltpu.CompilerParams(
                dimension_semantics=("parallel", "arbitrary"),
                vmem_limit_bytes=vmem_limit,
            ),
            cost_estimate=cost,
        )(x_p, w_p, b_p)

    return out[:B, :D]


def cross_network_ref(x, w_t, b):
    """Pure-JAX reference (mirrors the PyTorch forward)."""
    x0 = x.astype(jnp.float32)
    xc = x0
    for i in range(w_t.shape[0]):
        h = jnp.maximum(xc @ w_t[i].astype(jnp.float32)
                        + b[i].astype(jnp.float32), 0.0)
        xc = x0 * h + xc
    return xc.astype(x.dtype)


if __name__ == "__main__":
    # --- primary check: module-sized small shapes (resident-weights path) ---
    batch = 8
    dim_in = 32
    hidden_layer_num = 3

    key = jax.random.PRNGKey(0)
    kx, kw, kb = jax.random.split(key, 3)

    # PyTorch nn.Linear weight is (out, in) = (dim_in, dim_in); we store the
    # transpose so the kernel computes x @ W^T.
    x = jax.random.normal(kx, (batch, dim_in), dtype=jnp.float32)
    w = jax.random.normal(kw, (hidden_layer_num, dim_in, dim_in),
                          dtype=jnp.float32) * (1.0 / jnp.sqrt(dim_in))
    w_t = jnp.transpose(w, (0, 2, 1))
    b = jax.random.normal(kb, (hidden_layer_num, dim_in), dtype=jnp.float32) * 0.1

    out = jax.block_until_ready(cross_network(x, w_t, b))
    ref = cross_network_ref(x, w_t, b)
    assert out.shape == (batch, dim_in)
    assert jnp.allclose(out, ref, atol=1e-4, rtol=1e-4), "mismatch vs reference"

    # --- secondary check: batch tiling + lane/batch padding -----------------
    k2x, k2w, k2b = jax.random.split(jax.random.PRNGKey(1), 3)
    B2, D2, L2 = 20, 40, 2
    x2 = jax.random.normal(k2x, (B2, D2), dtype=jnp.float32)
    w2 = jax.random.normal(k2w, (L2, D2, D2), dtype=jnp.float32) * (1.0 / jnp.sqrt(D2))
    w2_t = jnp.transpose(w2, (0, 2, 1))
    b2 = jax.random.normal(k2b, (L2, D2), dtype=jnp.float32) * 0.1

    out2 = jax.block_until_ready(cross_network(x2, w2_t, b2, block_b=8))
    ref2 = cross_network_ref(x2, w2_t, b2)
    assert out2.shape == (B2, D2)
    assert jnp.allclose(out2, ref2, atol=1e-4, rtol=1e-4), "mismatch (tiled)"

    # --- streamed-weights path (v7x large-L*Dp^2 variant), forced here ------
    out3 = jax.block_until_ready(cross_network(x, w_t, b, stream_weights=True))
    assert jnp.allclose(out3, ref, atol=1e-4, rtol=1e-4), "mismatch (streamed)"

    # --- bf16-weights path (v6e/v7x bandwidth option); looser tolerance -----
    k4x = jax.random.PRNGKey(2)
    x4 = jax.random.normal(k4x, (16, dim_in), dtype=jnp.float32)
    out4 = jax.block_until_ready(
        cross_network(x4, w_t, b, weight_dtype=jnp.bfloat16))
    ref4 = cross_network_ref(x4, w_t, b)
    assert out4.shape == (16, dim_in)
    assert jnp.allclose(out4, ref4, atol=5e-2, rtol=5e-2), "mismatch (bf16 weights)"

    print("KERNEL_OK")
</pallas_src>

<mosaic_0001>
module attributes {stable_mosaic.version = 11 : i64} {
  func.func @_cross_kernel_resident(%arg0: i32, %arg1: memref<8x128xf32, #tpu.memory_space<vmem>>, %arg2: memref<3x128x128xf32, #tpu.memory_space<vmem>>, %arg3: memref<3x128xf32, #tpu.memory_space<vmem>>, %arg4: memref<8x128xf32, #tpu.memory_space<vmem>>) attributes {dimension_semantics = [#tpu.dimension_semantics<parallel>], iteration_bounds = array<i64: 1>, scalar_prefetch = 0 : i64, scratch_operands = 0 : i64, tpu.core_type = #tpu.core_type<tc>, window_params = [{transform_indices = @transform_0, window_bounds = array<i64: 8, 128>}, {pipeline_mode = #tpu.pipeline_mode<synchronous>, transform_indices = @transform_1, window_bounds = array<i64: 3, 128, 128>}, {pipeline_mode = #tpu.pipeline_mode<synchronous>, transform_indices = @transform_2, window_bounds = array<i64: 3, 128>}, {transform_indices = @transform_3, window_bounds = array<i64: 8, 128>}]} {
    %c0 = arith.constant 0 : index
    %c0_0 = arith.constant 0 : index
    %0 = vector.load %arg1[%c0, %c0_0] : memref<8x128xf32, #tpu.memory_space<vmem>>, vector<8x128xf32>
    %c0_1 = arith.constant 0 : index
    %c0_2 = arith.constant 0 : index
    %1 = vector.load %arg3[%c0_1, %c0_2] : memref<3x128xf32, #tpu.memory_space<vmem>>, vector<3x128xf32>
    %c0_3 = arith.constant 0 : index
    %c0_4 = arith.constant 0 : index
    %c0_5 = arith.constant 0 : index
    %2 = vector.load %arg2[%c0_3, %c0_4, %c0_5] : memref<3x128x128xf32, #tpu.memory_space<vmem>>, vector<1x128x128xf32>
    %3 = vector.shape_cast %2 : vector<1x128x128xf32> to vector<128x128xf32>
    %cst = arith.constant dense<0.000000e+00> : vector<8x128xf32>
    %4 = tpu.matmul %0, %3, %cst {dimension_numbers = #tpu.dot_dimension_numbers<[1], [0], [0], [1], [0, 0, 1, 1], [], []>} : vector<8x128xf32>, vector<128x128xf32>, vector<8x128xf32> -> vector<8x128xf32>
    %5 = vector.extract_strided_slice %1 {offsets = [0, 0], sizes = [1, 128], strides = [1, 1]} : vector<3x128xf32> to vector<1x128xf32>
    %6 = vector.broadcast %5 : vector<1x128xf32> to vector<8x128xf32>
    %7 = arith.addf %4, %6 : vector<8x128xf32>
    %cst_6 = arith.constant 0.000000e+00 : f32
    %8 = vector.broadcast %cst_6 : f32 to vector<8x128xf32>
    %9 = arith.maximumf %7, %8 : vector<8x128xf32>
    %10 = arith.mulf %0, %9 : vector<8x128xf32>
    %11 = arith.addf %10, %0 : vector<8x128xf32>
    %c1 = arith.constant 1 : index
    %c0_7 = arith.constant 0 : index
    %c0_8 = arith.constant 0 : index
    %12 = vector.load %arg2[%c1, %c0_7, %c0_8] : memref<3x128x128xf32, #tpu.memory_space<vmem>>, vector<1x128x128xf32>
    %13 = vector.shape_cast %12 : vector<1x128x128xf32> to vector<128x128xf32>
    %cst_9 = arith.constant dense<0.000000e+00> : vector<8x128xf32>
    %14 = tpu.matmul %11, %13, %cst_9 {dimension_numbers = #tpu.dot_dimension_numbers<[1], [0], [0], [1], [0, 0, 1, 1], [], []>} : vector<8x128xf32>, vector<128x128xf32>, vector<8x128xf32> -> vector<8x128xf32>
    %15 = vector.extract_strided_slice %1 {offsets = [1, 0], sizes = [1, 128], strides = [1, 1]} : vector<3x128xf32> to vector<1x128xf32>
    %16 = vector.broadcast %15 : vector<1x128xf32> to vector<8x128xf32>
    %17 = arith.addf %14, %16 : vector<8x128xf32>
    %cst_10 = arith.constant 0.000000e+00 : f32
    %18 = vector.broadcast %cst_10 : f32 to vector<8x128xf32>
    %19 = arith.maximumf %17, %18 : vector<8x128xf32>
    %20 = arith.mulf %0, %19 : vector<8x128xf32>
    %21 = arith.addf %20, %11 : vector<8x128xf32>
    %c2 = arith.constant 2 : index
    %c0_11 = arith.constant 0 : index
    %c0_12 = arith.constant 0 : index
    %22 = vector.load %arg2[%c2, %c0_11, %c0_12] : memref<3x128x128xf32, #tpu.memory_space<vmem>>, vector<1x128x128xf32>
    %23 = vector.shape_cast %22 : vector<1x128x128xf32> to vector<128x128xf32>
    %cst_13 = arith.constant dense<0.000000e+00> : vector<8x128xf32>
    %24 = tpu.matmul %21, %23, %cst_13 {dimension_numbers = #tpu.dot_dimension_numbers<[1], [0], [0], [1], [0, 0, 1, 1], [], []>} : vector<8x128xf32>, vector<128x128xf32>, vector<8x128xf32> -> vector<8x128xf32>
    %25 = vector.extract_strided_slice %1 {offsets = [2, 0], sizes = [1, 128], strides = [1, 1]} : vector<3x128xf32> to vector<1x128xf32>
    %26 = vector.broadcast %25 : vector<1x128xf32> to vector<8x128xf32>
    %27 = arith.addf %24, %26 : vector<8x128xf32>
    %cst_14 = arith.constant 0.000000e+00 : f32
    %28 = vector.broadcast %cst_14 : f32 to vector<8x128xf32>
    %29 = arith.maximumf %27, %28 : vector<8x128xf32>
    %30 = arith.mulf %0, %29 : vector<8x128xf32>
    %31 = arith.addf %30, %21 : vector<8x128xf32>
    %c0_15 = arith.constant 0 : index
    %c0_16 = arith.constant 0 : index
    %32 = vector.load %arg4[%c0_15, %c0_16] : memref<8x128xf32, #tpu.memory_space<vmem>>, vector<8x128xf32>
    tpu.vector_store %arg4[%c0_15, %c0_16], %31 {strides = array<i32>} : memref<8x128xf32, #tpu.memory_space<vmem>>, vector<8x128xf32>,
    return
  }
  func.func @transform_0(%arg0: i32) -> (i32, i32) {
    %c0_i32 = arith.constant 0 : i32
    %c0_i32_0 = arith.constant 0 : i32
    return %arg0, %c0_i32 : i32, i32
  }
  func.func @transform_1(%arg0: i32) -> (i32, i32, i32) {
    %c0_i32 = arith.constant 0 : i32
    %c0_i32_0 = arith.constant 0 : i32
    %c0_i32_1 = arith.constant 0 : i32
    %c0_i32_2 = arith.constant 0 : i32
    return %c0_i32, %c0_i32_0, %c0_i32_1 : i32, i32, i32
  }
  func.func @transform_2(%arg0: i32) -> (i32, i32) {
    %c0_i32 = arith.constant 0 : i32
    %c0_i32_0 = arith.constant 0 : i32
    %c0_i32_1 = arith.constant 0 : i32
    return %c0_i32, %c0_i32_0 : i32, i32
  }
  func.func @transform_3(%arg0: i32) -> (i32, i32) {
    %c0_i32 = arith.constant 0 : i32
    %c0_i32_0 = arith.constant 0 : i32
    return %arg0, %c0_i32 : i32, i32
  }
}

</mosaic_0001>

<llo_original>
// kernel: tpu_custom_call.1
$region0: #{tpu_custom_call.1}
  #allocation0 [shape = 'u32[]', space=smem, size = 0x4, offset = 0x4, fixed_abs, tag = 'smem constant byte address 0x4 - core index']
  #allocation1 [shape = 'u32[144,128]{1,0:T(1,128)}', space=vmem, size = 0x12000, scoped, tag = 'internal scratch']
  %s0 = inlined_call_operand.hbm [shape: f32[8,128], index: 0, kind: input, shape index: {}]
  %s1 = inlined_call_operand.hbm [shape: f32[3,128,128], index: 1, kind: input, shape index: {}]
  %s2 = inlined_call_operand.hbm [shape: f32[3,128], index: 2, kind: input, shape index: {}]
  %s3 = inlined_call_operand.hbm [shape: f32[8,128], index: 3, kind: output, shape index: {}]
  %s4 = sld [smem:[#allocation0]]
  $region34: #{tpu_custom_call.1} parent=0
    _
  %s6 = ssub.s32 1, %s4
  %s7 = scalar_select 0, %s6, %s4
  $region1: #{tpu_custom_call.1} parent=0
    #allocation2 [shape = 'u8[4096]{0}', space=vmem, size = 0x1000, scoped, tag = 'input window, operand 0, single buffered']
    #allocation3 [shape = 's32[1]{0}', space=sflag, size = 0x4, scoped, tag = 'scoped memory for tpu_custom_call.1']
    #allocation4 [shape = 's32[1]{0}', space=sflag, size = 0x4, scoped, tag = 'scoped memory for tpu_custom_call.1']
    #allocation5 [shape = 'u8[196608]{0}', space=vmem, size = 0x30000, scoped, tag = 'input window, operand 1, single buffered']
    #allocation6 [shape = 's32[1]{0}', space=sflag, size = 0x4, scoped, tag = 'scoped memory for tpu_custom_call.1']
    #allocation7 [shape = 'u8[2048]{0}', space=vmem, size = 0x800, scoped, tag = 'input window, operand 2, single buffered']
    #allocation8 [shape = 'u8[4096]{0}', space=vmem, size = 0x1000, scoped, tag = 'output window, operand 0, single buffered']
    %8 = vsyncpa [#allocation3], 0
    %9 = vsyncpa [#allocation6], 0
    %10 = vsyncpa [#allocation4], 0
    // Predicated region
    $region2: #{tpu_custom_call.1} parent=1 // pred_check
      _
    $region3: #{tpu_custom_call.1} parent=1 // pred_check_branch
      %12 = sbr.rel (0) target = $region5
    $region4: #{tpu_custom_call.1} parent=1 // pred_region
      %s14 = ssub.s32 128, 128
      %15 = vsyncadd [#allocation3], %s14
      %s17 = sshll.u32 [#allocation2], 4
      %s18 = int_to_ptr.vmem [resolvable:$true] %s17
      %20 = dma.hbm_to_vmem [thread:$0]  %s0, 128, %s18, [#allocation3]
    $region5: #{tpu_custom_call.1} parent=1 // pred_fallthru
      _
    // Predicated region
    $region6: #{tpu_custom_call.1} parent=1 // pred_check
      _
    $region7: #{tpu_custom_call.1} parent=1 // pred_check_branch
      %22 = sbr.rel (0) target = $region9
    $region8: #{tpu_custom_call.1} parent=1 // pred_region
      %s24 = ssub.s32 6144, 6144
      %25 = vsyncadd [#allocation6], %s24
      %s26 = sshll.u32 [#allocation5], 4
      %s27 = int_to_ptr.vmem [resolvable:$true] %s26
      %32 = dma.hbm_to_vmem [thread:$0]  %s1, 6144, %s27, [#allocation6], 128, 128, 8
    $region9: #{tpu_custom_call.1} parent=1 // pred_fallthru
      _
    // Predicated region
    $region10: #{tpu_custom_call.1} parent=1 // pred_check
      _
    $region11: #{tpu_custom_call.1} parent=1 // pred_check_branch
      %34 = sbr.rel (0) target = $region13
    $region12: #{tpu_custom_call.1} parent=1 // pred_region
      %s36 = ssub.s32 64, 64
      %37 = vsyncadd [#allocation6], %s36
      %s39 = sshll.u32 [#allocation7], 4
      %s40 = int_to_ptr.vmem [resolvable:$true] %s39
      %42 = dma.hbm_to_vmem [thread:$0]  %s2, 64, %s40, [#allocation6]
    $region13: #{tpu_custom_call.1} parent=1 // pred_fallthru
      _
    // Predicated region
    $region14: #{tpu_custom_call.1} parent=1 // pred_check
      _
    $region15: #{tpu_custom_call.1} parent=1 // pred_check_branch
      %44 = sbr.rel (0) target = $region17
    $region16: #{tpu_custom_call.1} parent=1 // pred_region
      %45 = dma.done [#allocation3], 128
    $region17: #{tpu_custom_call.1} parent=1 // pred_fallthru
      _
    // Predicated region
    $region18: #{tpu_custom_call.1} parent=1 // pred_check
      _
    $region19: #{tpu_custom_call.1} parent=1 // pred_check_branch
      %47 = sbr.rel (0) target = $region21
    $region20: #{tpu_custom_call.1} parent=1 // pred_region
      %48 = dma.done [#allocation6], 6144
    $region21: #{tpu_custom_call.1} parent=1 // pred_fallthru
      _
    // Predicated region
    $region22: #{tpu_custom_call.1} parent=1 // pred_check
      _
    $region23: #{tpu_custom_call.1} parent=1 // pred_check_branch
      %50 = sbr.rel (0) target = $region25
    $region24: #{tpu_custom_call.1} parent=1 // pred_region
      %51 = dma.done [#allocation6], 64
    $region25: #{tpu_custom_call.1} parent=1 // pred_fallthru
      _
    %v52 = vld [vmem:[#allocation2] sm:$0xff]
    %v53 = vld [vmem:[#allocation7] sm:$0x7]
    %v54 = vld [vmem:[#allocation5] sm:$0xff]
    %v55 = vld [vmem:[#allocation5 + $0x8] sm:$0xff]
    %v56 = vld [vmem:[#allocation5 + $0x10] sm:$0xff]
    %v57 = vld [vmem:[#allocation5 + $0x18] sm:$0xff]
    %v58 = vld [vmem:[#allocation5 + $0x20] sm:$0xff]
    %v59 = vld [vmem:[#allocation5 + $0x28] sm:$0xff]
    %v60 = vld [vmem:[#allocation5 + $0x30] sm:$0xff]
    %v61 = vld [vmem:[#allocation5 + $0x38] sm:$0xff]
    %v62 = vld [vmem:[#allocation5 + $0x40] sm:$0xff]
    %v63 = vld [vmem:[#allocation5 + $0x48] sm:$0xff]
    %v64 = vld [vmem:[#allocation5 + $0x50] sm:$0xff]
    %v65 = vld [vmem:[#allocation5 + $0x58] sm:$0xff]
    %v66 = vld [vmem:[#allocation5 + $0x60] sm:$0xff]
    %v67 = vld [vmem:[#allocation5 + $0x68] sm:$0xff]
    %v68 = vld [vmem:[#allocation5 + $0x70] sm:$0xff]
    %v69 = vld [vmem:[#allocation5 + $0x78] sm:$0xff]
    %v70 = vlaneseq
    %v71 = vshrl.u32 %v70, 7
    %v72 = vsub.s32 0, %v71
    %v73 = vrot.slane %v53, %v72
    %74 = vmatprep.subr.mxu0 0.0
    %75 = vmatpush1.msra.mxu0 %v69
    %76 = vmatprep.subr.mxu0 0.0
    %77 = vmatpush1.msra.mxu0 %v68
    %78 = vmatprep.subr.mxu0 0.0
    %79 = vmatpush1.msra.mxu0 %v67
    %80 = vmatprep.subr.mxu0 0.0
    %81 = vmatpush1.msra.mxu0 %v66
    %82 = vmatprep.subr.mxu0 0.0
    %83 = vmatpush1.msra.mxu0 %v65
    %84 = vmatprep.subr.mxu0 0.0
    %85 = vmatpush1.msra.mxu0 %v64
    %86 = vmatprep.subr.mxu0 0.0
    %87 = vmatpush1.msra.mxu0 %v63
    %88 = vmatprep.subr.mxu0 0.0
    %89 = vmatpush1.msra.mxu0 %v62
    %90 = vmatprep.subr.mxu0 0.0
    %91 = vmatpush1.msra.mxu0 %v61
    %92 = vmatprep.subr.mxu0 0.0
    %93 = vmatpush1.msra.mxu0 %v60
    %94 = vmatprep.subr.mxu0 0.0
    %95 = vmatpush1.msra.mxu0 %v59
    %96 = vmatprep.subr.mxu0 0.0
    %97 = vmatpush1.msra.mxu0 %v58
    %98 = vmatprep.subr.mxu0 0.0
    %99 = vmatpush1.msra.mxu0 %v57
    %100 = vmatprep.subr.mxu0 0.0
    %101 = vmatpush1.msra.mxu0 %v56
    %102 = vmatprep.subr.mxu0 0.0
    %103 = vmatpush1.msra.mxu0 %v55
    %104 = vmatprep.subr.mxu0 0.0
    %105 = vmatpush1.msra.mxu0 %v54
    %106 = vmatprep.subr.mxu0 0.0
    %107 = vmatpush2.msra.mxu0 0.0
    %108 = vmatprep.subr.mxu0 0.0
    %109 = vmatpush2.msra.mxu0 0.0
    %110 = vmatprep.subr.mxu0 0.0
    %111 = vmatpush2.msra.mxu0 0.0
    %112 = vmatprep.subr.mxu0 0.0
    %113 = vmatpush2.msra.mxu0 0.0
    %114 = vmatprep.subr.mxu0 0.0
    %115 = vmatpush2.msra.mxu0 0.0
    %116 = vmatprep.subr.mxu0 0.0
    %117 = vmatpush2.msra.mxu0 0.0
    %118 = vmatprep.subr.mxu0 0.0
    %119 = vmatpush2.msra.mxu0 0.0
    %120 = vmatprep.subr.mxu0 0.0
    %121 = vmatpush2.msra.mxu0 0.0
    %122 = vmatprep.subr.mxu0 0.0
    %123 = vmatpush2.msra.mxu0 0.0
    %124 = vmatprep.subr.mxu0 0.0
    %125 = vmatpush2.msra.mxu0 0.0
    %126 = vmatprep.subr.mxu0 0.0
    %127 = vmatpush2.msra.mxu0 0.0
    %128 = vmatprep.subr.mxu0 0.0
    %129 = vmatpush2.msra.mxu0 0.0
    %130 = vmatprep.subr.mxu0 0.0
    %131 = vmatpush2.msra.mxu0 0.0
    %132 = vmatprep.subr.mxu0 0.0
    %133 = vmatpush2.msra.mxu0 0.0
    %134 = vmatprep.subr.mxu0 0.0
    %135 = vmatpush2.msra.mxu0 0.0
    %136 = vmatprep.subr.mxu0 0.0
    %137 = vmatpush2.msra.mxu0 0.0
    %138 = vmatprep.mubr.f32.mxu0 0.0
    %139 = vmatmul.mubr.f32.gmra.mxu0 %v52
    %v140 = vpop.f32.mrf.mxu0
    %v141 = vadd.f32 %v73, %v140
    %v142 = vpop.f32.mrf.mxu0
    %143 = vdwg.mxu0
    %v144 = vmax.f32 %v141, 0.0
    %v145 = vmul.f32 %v52, %v144
    %v146 = vadd.f32 %v145, %v52
    %s147 = scalar_lea.vmem [#allocation5], 128
    %v148 = vld [vmem:[%s147] sm:$0xff]
    %v149 = vld [vmem:[%s147 + $0x8] sm:$0xff]
    %v150 = vld [vmem:[%s147 + $0x10] sm:$0xff]
    %v151 = vld [vmem:[%s147 + $0x18] sm:$0xff]
    %v152 = vld [vmem:[%s147 + $0x20] sm:$0xff]
    %v153 = vld [vmem:[%s147 + $0x28] sm:$0xff]
    %v154 = vld [vmem:[%s147 + $0x30] sm:$0xff]
    %v155 = vld [vmem:[%s147 + $0x38] sm:$0xff]
    %v156 = vld [vmem:[%s147 + $0x40] sm:$0xff]
    %v157 = vld [vmem:[%s147 + $0x48] sm:$0xff]
    %v158 = vld [vmem:[%s147 + $0x50] sm:$0xff]
    %v159 = vld [vmem:[%s147 + $0x58] sm:$0xff]
    %v160 = vld [vmem:[%s147 + $0x60] sm:$0xff]
    %v161 = vld [vmem:[%s147 + $0x68] sm:$0xff]
    %v162 = vld [vmem:[%s147 + $0x70] sm:$0xff]
    %v163 = vld [vmem:[%s147 + $0x78] sm:$0xff]
    %v164 = vlaneseq
    %v165 = vshrl.u32 %v164, 7
    %v166 = vsub.s32 1, %v165
    %v167 = vrot.slane %v53, %v166
    %168 = vmatprep.subr.mxu0 0.0
    %169 = vmatpush1.msra.mxu0 %v163
    %170 = vmatprep.subr.mxu0 0.0
    %171 = vmatpush1.msra.mxu0 %v162
    %172 = vmatprep.subr.mxu0 0.0
    %173 = vmatpush1.msra.mxu0 %v161
    %174 = vmatprep.subr.mxu0 0.0
    %175 = vmatpush1.msra.mxu0 %v160
    %176 = vmatprep.subr.mxu0 0.0
    %177 = vmatpush1.msra.mxu0 %v159
    %178 = vmatprep.subr.mxu0 0.0
    %179 = vmatpush1.msra.mxu0 %v158
    %180 = vmatprep.subr.mxu0 0.0
    %181 = vmatpush1.msra.mxu0 %v157
    %182 = vmatprep.subr.mxu0 0.0
    %183 = vmatpush1.msra.mxu0 %v156
    %184 = vmatprep.subr.mxu0 0.0
    %185 = vmatpush1.msra.mxu0 %v155
    %186 = vmatprep.subr.mxu0 0.0
    %187 = vmatpush1.msra.mxu0 %v154
    %188 = vmatprep.subr.mxu0 0.0
    %189 = vmatpush1.msra.mxu0 %v153
    %190 = vmatprep.subr.mxu0 0.0
    %191 = vmatpush1.msra.mxu0 %v152
    %192 = vmatprep.subr.mxu0 0.0
    %193 = vmatpush1.msra.mxu0 %v151
    %194 = vmatprep.subr.mxu0 0.0
    %195 = vmatpush1.msra.mxu0 %v150
    %196 = vmatprep.subr.mxu0 0.0
    %197 = vmatpush1.msra.mxu0 %v149
    %198 = vmatprep.subr.mxu0 0.0
    %199 = vmatpush1.msra.mxu0 %v148
    %200 = vmatprep.subr.mxu0 0.0
    %201 = vmatpush2.msra.mxu0 0.0
    %202 = vmatprep.subr.mxu0 0.0
    %203 = vmatpush2.msra.mxu0 0.0
    %204 = vmatprep.subr.mxu0 0.0
    %205 = vmatpush2.msra.mxu0 0.0
    %206 = vmatprep.subr.mxu0 0.0
    %207 = vmatpush2.msra.mxu0 0.0
    %208 = vmatprep.subr.mxu0 0.0
    %209 = vmatpush2.msra.mxu0 0.0
    %210 = vmatprep.subr.mxu0 0.0
    %211 = vmatpush2.msra.mxu0 0.0
    %212 = vmatprep.subr.mxu0 0.0
    %213 = vmatpush2.msra.mxu0 0.0
    %214 = vmatprep.subr.mxu0 0.0
    %215 = vmatpush2.msra.mxu0 0.0
    %216 = vmatprep.subr.mxu0 0.0
    %217 = vmatpush2.msra.mxu0 0.0
    %218 = vmatprep.subr.mxu0 0.0
    %219 = vmatpush2.msra.mxu0 0.0
    %220 = vmatprep.subr.mxu0 0.0
    %221 = vmatpush2.msra.mxu0 0.0
    %222 = vmatprep.subr.mxu0 0.0
    %223 = vmatpush2.msra.mxu0 0.0
    %224 = vmatprep.subr.mxu0 0.0
    %225 = vmatpush2.msra.mxu0 0.0
    %226 = vmatprep.subr.mxu0 0.0
    %227 = vmatpush2.msra.mxu0 0.0
    %228 = vmatprep.subr.mxu0 0.0
    %229 = vmatpush2.msra.mxu0 0.0
    %230 = vmatprep.subr.mxu0 0.0
    %231 = vmatpush2.msra.mxu0 0.0
    %232 = vmatprep.mubr.f32.mxu0 0.0
    %233 = vmatmul.mubr.f32.gmra.mxu0 %v146
    %v234 = vpop.f32.mrf.mxu0
    %v235 = vadd.f32 %v167, %v234
    %v236 = vpop.f32.mrf.mxu0
    %237 = vdwg.mxu0
    %v238 = vmax.f32 %v235, 0.0
    %v239 = vmul.f32 %v52, %v238
    %v240 = vadd.f32 %v239, %v146
    %s241 = scalar_lea.vmem [#allocation5], 256
    %v242 = vld [vmem:[%s241] sm:$0xff]
    %v243 = vld [vmem:[%s241 + $0x8] sm:$0xff]
    %v244 = vld [vmem:[%s241 + $0x10] sm:$0xff]
    %v245 = vld [vmem:[%s241 + $0x18] sm:$0xff]
    %v246 = vld [vmem:[%s241 + $0x20] sm:$0xff]
    %v247 = vld [vmem:[%s241 + $0x28] sm:$0xff]
    %v248 = vld [vmem:[%s241 + $0x30] sm:$0xff]
    %v249 = vld [vmem:[%s241 + $0x38] sm:$0xff]
    %v250 = vld [vmem:[%s241 + $0x40] sm:$0xff]
    %v251 = vld [vmem:[%s241 + $0x48] sm:$0xff]
    %v252 = vld [vmem:[%s241 + $0x50] sm:$0xff]
    %v253 = vld [vmem:[%s241 + $0x58] sm:$0xff]
    %v254 = vld [vmem:[%s241 + $0x60] sm:$0xff]
    %v255 = vld [vmem:[%s241 + $0x68] sm:$0xff]
    %v256 = vld [vmem:[%s241 + $0x70] sm:$0xff]
    %v257 = vld [vmem:[%s241 + $0x78] sm:$0xff]
    %v258 = vlaneseq
    %v259 = vshrl.u32 %v258, 7
    %v260 = vsub.s32 2, %v259
    %v261 = vrot.slane %v53, %v260
    %262 = vmatprep.subr.mxu0 0.0
    %263 = vmatpush1.msra.mxu0 %v257
    %264 = vmatprep.subr.mxu0 0.0
    %265 = vmatpush1.msra.mxu0 %v256
    %266 = vmatprep.subr.mxu0 0.0
    %267 = vmatpush1.msra.mxu0 %v255
    %268 = vmatprep.subr.mxu0 0.0
    %269 = vmatpush1.msra.mxu0 %v254
    %270 = vmatprep.subr.mxu0 0.0
    %271 = vmatpush1.msra.mxu0 %v253
    %272 = vmatprep.subr.mxu0 0.0
    %273 = vmatpush1.msra.mxu0 %v252
    %274 = vmatprep.subr.mxu0 0.0
    %275 = vmatpush1.msra.mxu0 %v251
    %276 = vmatprep.subr.mxu0 0.0
    %277 = vmatpush1.msra.mxu0 %v250
    %278 = vmatprep.subr.mxu0 0.0
    %279 = vmatpush1.msra.mxu0 %v249
    %280 = vmatprep.subr.mxu0 0.0
    %281 = vmatpush1.msra.mxu0 %v248
    %282 = vmatprep.subr.mxu0 0.0
    %283 = vmatpush1.msra.mxu0 %v247
    %284 = vmatprep.subr.mxu0 0.0
    %285 = vmatpush1.msra.mxu0 %v246
    %286 = vmatprep.subr.mxu0 0.0
    %287 = vmatpush1.msra.mxu0 %v245
    %288 = vmatprep.subr.mxu0 0.0
    %289 = vmatpush1.msra.mxu0 %v244
    %290 = vmatprep.subr.mxu0 0.0
    %291 = vmatpush1.msra.mxu0 %v243
    %292 = vmatprep.subr.mxu0 0.0
    %293 = vmatpush1.msra.mxu0 %v242
    %294 = vmatprep.subr.mxu0 0.0
    %295 = vmatpush2.msra.mxu0 0.0
    %296 = vmatprep.subr.mxu0 0.0
    %297 = vmatpush2.msra.mxu0 0.0
    %298 = vmatprep.subr.mxu0 0.0
    %299 = vmatpush2.msra.mxu0 0.0
    %300 = vmatprep.subr.mxu0 0.0
    %301 = vmatpush2.msra.mxu0 0.0
    %302 = vmatprep.subr.mxu0 0.0
    %303 = vmatpush2.msra.mxu0 0.0
    %304 = vmatprep.subr.mxu0 0.0
    %305 = vmatpush2.msra.mxu0 0.0
    %306 = vmatprep.subr.mxu0 0.0
    %307 = vmatpush2.msra.mxu0 0.0
    %308 = vmatprep.subr.mxu0 0.0
    %309 = vmatpush2.msra.mxu0 0.0
    %310 = vmatprep.subr.mxu0 0.0
    %311 = vmatpush2.msra.mxu0 0.0
    %312 = vmatprep.subr.mxu0 0.0
    %313 = vmatpush2.msra.mxu0 0.0
    %314 = vmatprep.subr.mxu0 0.0
    %315 = vmatpush2.msra.mxu0 0.0
    %316 = vmatprep.subr.mxu0 0.0
    %317 = vmatpush2.msra.mxu0 0.0
    %318 = vmatprep.subr.mxu0 0.0
    %319 = vmatpush2.msra.mxu0 0.0
    %320 = vmatprep.subr.mxu0 0.0
    %321 = vmatpush2.msra.mxu0 0.0
    %322 = vmatprep.subr.mxu0 0.0
    %323 = vmatpush2.msra.mxu0 0.0
    %324 = vmatprep.subr.mxu0 0.0
    %325 = vmatpush2.msra.mxu0 0.0
    %326 = vmatprep.mubr.f32.mxu0 0.0
    %327 = vmatmul.mubr.f32.gmra.mxu0 %v240
    %v328 = vpop.f32.mrf.mxu0
    %v329 = vadd.f32 %v261, %v328
    %v330 = vpop.f32.mrf.mxu0
    %331 = vdwg.mxu0
    %v332 = vmax.f32 %v329, 0.0
    %v333 = vmul.f32 %v52, %v332
    %v334 = vadd.f32 %v333, %v240
    %335 = vst [vmem:[#allocation8] sm:$0xff] %v334
    // Predicated region
    $region26: #{tpu_custom_call.1} parent=1 // pred_check
      _
    $region27: #{tpu_custom_call.1} parent=1 // pred_check_branch
      %337 = sbr.rel (0) target = $region29
    $region28: #{tpu_custom_call.1} parent=1 // pred_region
      %s339 = ssub.s32 128, 128
      %340 = vsyncadd [#allocation4], %s339
      %s342 = sshll.u32 [#allocation8], 4
      %s343 = int_to_ptr.vmem [resolvable:$true] %s342
      %345 = dma.vmem_to_hbm [thread:$0]  %s343, 128, %s3, [#allocation4]
    $region29: #{tpu_custom_call.1} parent=1 // pred_fallthru
      _
    // Predicated region
    $region30: #{tpu_custom_call.1} parent=1 // pred_check
      _
    $region31: #{tpu_custom_call.1} parent=1 // pred_check_branch
      %347 = sbr.rel (0) target = $region33
    $region32: #{tpu_custom_call.1} parent=1 // pred_region
      %348 = dma.done [#allocation4], 128
    $region33: #{tpu_custom_call.1} parent=1 // pred_fallthru
      _
    %349 = vsyncpa [#allocation3], 1
    %350 = vsyncpa [#allocation6], 1
    %351 = vsyncpa [#allocation4], 1

</llo_original>
